<compile_context>
chip_gen: v7x
topology: tpu7x:2x2x1
jax: 0.10.0
libtpu: 0.0.40
codegen_flags: <defaults>
</compile_context>

<pallas_src>
import functools
import math

import jax
import jax.numpy as jnp
from jax.experimental import pallas as pl
from jax.experimental.pallas import tpu as pltpu


def _hh_kernel_reduce(z_ref, v_ref, w_ref, o_ref):
    """One (tb, L) tile; one sample per row (L = possibly lane-padded feature dim)."""
    z = z_ref[...].astype(jnp.float32)                  # (tb, L)
    s = z * v_ref[...]                                  # per-lane products
    dot = jnp.sum(s, axis=-1, keepdims=True)            # (tb, 1) XLU cross-lane reduce
    o_ref[...] = (z - dot * w_ref[...]).astype(o_ref.dtype)


def _hh_kernel_packed(z_ref, v_ref, w_ref, p_ref, o_ref):
    """One (tb, L) tile; G consecutive samples packed into each L-lane row.

    p_ref is a constant (L, L) block-diagonal 0/1 matrix (P[i, j] = 1 iff
    i // D == j // D), so s @ P gives every lane its own sample's dot (v . z).
    The segmented reduction runs on the otherwise-idle MXU instead of the VPU.
    """
    z = z_ref[...].astype(jnp.float32)                  # (tb, L)
    s = z * v_ref[...]                                  # (tb, L)
    dot = jnp.dot(s, p_ref[...],
                  preferred_element_type=jnp.float32,
                  precision=jax.lax.Precision.HIGHEST)  # (tb, L) per-sample dots
    o_ref[...] = (z - dot * w_ref[...]).astype(o_ref.dtype)


def householder_forward(z, v, *, block_rows=None,
                        target_block_bytes=4 * 1024 * 1024,
                        small_problem_bytes=8 * 1024,
                        max_packed_lanes=512,
                        vmem_limit_bytes=32 * 1024 * 1024,
                        donate_z=False):
    """Returns (H z, log_det) with H = I - 2 v v^T / ||v||^2 and log_det = 0."""
    B, D = z.shape
    out_dtype = z.dtype

    # ---- hoisted, grid-invariant scalar work (no clamp: matches the reference) ----
    v32 = v.astype(jnp.float32)
    norm_sq = jnp.sum(v32 * v32)
    w32 = (2.0 / norm_sq) * v32                          # 2 v / ||v||^2

    # ---- tiny problems: kernel-launch overhead dominates; use fused XLA ----
    if B * D * z.dtype.itemsize <= small_problem_bytes:
        z32 = z.astype(jnp.float32)
        dot = jnp.sum(z32 * v32[None, :], axis=1, keepdims=True)
        out = (z32 - dot * w32[None, :]).astype(out_dtype)
        return out, jnp.zeros((), dtype=out_dtype)

    # ---- choose a lane-dense layout: L is always a multiple of 128 ----
    if D % 128 == 0:
        G, Dp = 1, D                                     # already lane-dense
    elif D < 128 and (128 // math.gcd(D, 128)) * D <= max_packed_lanes:
        G, Dp = 128 // math.gcd(D, 128), D               # pack G samples per row
    else:
        G, Dp = 1, ((D + 127) // 128) * 128              # zero-pad feature lanes

    zp, vp, wp = z, v32, w32
    if Dp != D:
        zp = jnp.pad(zp, ((0, 0), (0, Dp - D)))          # padded lanes: v=w=0 -> out=0
        vp = jnp.pad(vp, (0, Dp - D))
        wp = jnp.pad(wp, (0, Dp - D))
    b_pad = (-B) % G
    if b_pad:
        zp = jnp.pad(zp, ((0, b_pad), (0, 0)))           # keep packing instead of dropping it
    L = G * Dp
    Bp = (B + b_pad) // G
    zp = zp.reshape(Bp, L)                               # row-major contiguous -> free reshape
    v_t = jnp.tile(vp, (G,)).reshape(1, L)
    w_t = jnp.tile(wp, (G,)).reshape(1, L)

    # ---- batch tile: ~target_block_bytes of z per grid step, multiple of 8 rows ----
    bytes_per_row = L * zp.dtype.itemsize
    max_rows = max(8, (target_block_bytes // bytes_per_row) // 8 * 8)
    if block_rows is not None:
        tb = min(Bp, max(8, block_rows // 8 * 8))
    else:
        tb = min(Bp, max_rows)
        if Bp >= 16:                                     # >= 2 grid steps -> both v7x TCs busy
            tb = min(tb, (pl.cdiv(Bp, 2) + 7) // 8 * 8)
    if tb < Bp:
        tb = max(8, tb // 8 * 8)
    grid = (pl.cdiv(Bp, tb),)                            # remainder tile: masked OOB stores

    in_specs = [
        pl.BlockSpec((tb, L), lambda i: (i, 0)),         # z tile streamed over the batch
        pl.BlockSpec((1, L), lambda i: (0, 0)),          # shared tiled v
        pl.BlockSpec((1, L), lambda i: (0, 0)),          # shared tiled 2v/||v||^2
    ]
    if G > 1:
        lane = jnp.arange(L)
        p_mat = (lane[:, None] // D == lane[None, :] // D).astype(jnp.float32)
        in_specs.append(pl.BlockSpec((L, L), lambda i: (0, 0)))  # constant block-diag P
        kernel, args = _hh_kernel_packed, (zp, v_t, w_t, p_mat)
    else:
        kernel, args = _hh_kernel_reduce, (zp, v_t, w_t)

    out_p = pl.pallas_call(
        kernel,
        out_shape=jax.ShapeDtypeStruct((Bp, L), out_dtype),
        grid_spec=pltpu.PrefetchScalarGridSpec(
            num_scalar_prefetch=0,
            grid=grid,
            in_specs=in_specs,
            out_specs=pl.BlockSpec((tb, L), lambda i: (i, 0)),
        ),
        compiler_params=pltpu.CompilerParams(
            dimension_semantics=("parallel",),           # megacore-shard the batch axis
            vmem_limit_bytes=vmem_limit_bytes,           # safe on v5e/v6e/v7x
        ),
        input_output_aliases={0: 0} if donate_z else {},
    )(*args)

    out = out_p.reshape(Bp * G, Dp)
    if b_pad or Dp != D:
        out = out[:B, :D]
    # TODO(synk): stream z/out as bf16 on v6e/v7x (keep the f32 dot/update) for ~2x on
    # the HBM-bound path; kept at the caller's dtype here to match the reference.
    log_det = jnp.zeros((), dtype=out_dtype)             # orthogonal transform -> |det| = 1
    return out, log_det


def _ref(z, v):
    z32 = z.astype(jnp.float32)
    v32 = v.astype(jnp.float32)
    dot = jnp.sum(z32 * v32[None, :], axis=1, keepdims=True)
    return (z32 - 2.0 * dot * v32[None, :] / jnp.sum(v32 * v32)).astype(z.dtype)


if __name__ == "__main__":
    key = jax.random.PRNGKey(0)
    ks = jax.random.split(key, 12)

    # 1) Module-sized case (batch=16, input_dimension=32) -> small-problem fast path.
    B, D = 16, 32
    z = jax.random.normal(ks[0], (B, D), dtype=jnp.float32)
    v = jax.random.uniform(ks[1], (D,), dtype=jnp.float32, minval=-1.0, maxval=1.0)
    out, log_det = householder_forward(z, v)
    out = jax.block_until_ready(out)
    assert out.shape == (B, D) and out.dtype == jnp.float32
    assert jnp.allclose(out, _ref(z, v), atol=1e-5, rtol=1e-5)
    assert float(log_det) == 0.0

    # 2) Packed MXU path: D=32 -> 4 samples per 128-lane row, grid >= 2.
    z2 = jax.random.normal(ks[2], (512, D), dtype=jnp.float32)
    out2, _ = householder_forward(z2, v)
    out2 = jax.block_until_ready(out2)
    assert jnp.allclose(out2, _ref(z2, v), atol=1e-5, rtol=1e-5)

    # 3) Packed path with batch padding (258 % 4 != 0) and a remainder tile.
    z3 = jax.random.normal(ks[3], (258, D), dtype=jnp.float32)
    out3, _ = householder_forward(z3, v)
    out3 = jax.block_until_ready(out3)
    assert out3.shape == (258, D)
    assert jnp.allclose(out3, _ref(z3, v), atol=1e-5, rtol=1e-5)

    # 4) Wide features (D % 128 == 0): single XLU-reduce path, grid >= 2.
    D4 = 256
    z4 = jax.random.normal(ks[4], (64, D4), dtype=jnp.float32)
    v4 = jax.random.uniform(ks[5], (D4,), dtype=jnp.float32, minval=-1.0, maxval=1.0)
    out4, _ = householder_forward(z4, v4)
    out4 = jax.block_until_ready(out4)
    assert jnp.allclose(out4, _ref(z4, v4), atol=1e-5, rtol=1e-5)

    # 5) Single full block (grid = 1), odd row count.
    z5 = jax.random.normal(ks[6], (12, D4), dtype=jnp.float32)
    out5, _ = householder_forward(z5, v4)
    out5 = jax.block_until_ready(out5)
    assert jnp.allclose(out5, _ref(z5, v4), atol=1e-5, rtol=1e-5)

    # 6) Awkward D (40): lane-padded to 128 so stores stay lane-dense.
    D6 = 40
    z6 = jax.random.normal(ks[7], (96, D6), dtype=jnp.float32)
    v6 = jax.random.uniform(ks[8], (D6,), dtype=jnp.float32, minval=-1.0, maxval=1.0)
    out6, _ = householder_forward(z6, v6)
    out6 = jax.block_until_ready(out6)
    assert out6.shape == (96, D6)
    assert jnp.allclose(out6, _ref(z6, v6), atol=1e-5, rtol=1e-5)

    # 7) Awkward D (48): packed via G = 128/gcd(48,128) = 8 -> L = 384 lanes.
    D7 = 48
    z7 = jax.random.normal(ks[9], (128, D7), dtype=jnp.float32)
    v7 = jax.random.uniform(ks[10], (D7,), dtype=jnp.float32, minval=-1.0, maxval=1.0)
    out7, _ = householder_forward(z7, v7)
    out7 = jax.block_until_ready(out7)
    assert jnp.allclose(out7, _ref(z7, v7), atol=1e-5, rtol=1e-5)

    print("KERNEL_OK")
</pallas_src>

<mosaic_0001>
module attributes {stable_mosaic.version = 11 : i64} {
  func.func @_hh_kernel_packed(%arg0: i32, %arg1: memref<64x128xf32, #tpu.memory_space<vmem>>, %arg2: memref<1x128xf32, #tpu.memory_space<vmem>>, %arg3: memref<1x128xf32, #tpu.memory_space<vmem>>, %arg4: memref<128x128xf32, #tpu.memory_space<vmem>>, %arg5: memref<64x128xf32, #tpu.memory_space<vmem>>) attributes {dimension_semantics = [#tpu.dimension_semantics<parallel>], iteration_bounds = array<i64: 2>, scalar_prefetch = 0 : i64, scratch_operands = 0 : i64, tpu.core_type = #tpu.core_type<tc>, window_params = [{transform_indices = @transform_0, window_bounds = array<i64: 64, 128>}, {pipeline_mode = #tpu.pipeline_mode<synchronous>, transform_indices = @transform_1, window_bounds = array<i64: 1, 128>}, {pipeline_mode = #tpu.pipeline_mode<synchronous>, transform_indices = @transform_2, window_bounds = array<i64: 1, 128>}, {pipeline_mode = #tpu.pipeline_mode<synchronous>, transform_indices = @transform_3, window_bounds = array<i64: 128, 128>}, {transform_indices = @transform_4, window_bounds = array<i64: 64, 128>}]} {
    %c0 = arith.constant 0 : index
    %c0_0 = arith.constant 0 : index
    %0 = vector.load %arg1[%c0, %c0_0] : memref<64x128xf32, #tpu.memory_space<vmem>>, vector<64x128xf32>
    %c0_1 = arith.constant 0 : index
    %c0_2 = arith.constant 0 : index
    %1 = vector.load %arg2[%c0_1, %c0_2] : memref<1x128xf32, #tpu.memory_space<vmem>>, vector<1x128xf32>
    %2 = vector.broadcast %1 : vector<1x128xf32> to vector<64x128xf32>
    %3 = arith.mulf %0, %2 : vector<64x128xf32>
    %c0_3 = arith.constant 0 : index
    %c0_4 = arith.constant 0 : index
    %4 = vector.load %arg4[%c0_3, %c0_4] : memref<128x128xf32, #tpu.memory_space<vmem>>, vector<128x128xf32>
    %cst = arith.constant dense<0.000000e+00> : vector<64x128xf32>
    %5 = tpu.matmul %3, %4, %cst {dimension_numbers = #tpu.dot_dimension_numbers<[1], [0], [0], [1], [0, 0, 1, 1], [], []>, precision = #tpu.contract_precision<fp32>} : vector<64x128xf32>, vector<128x128xf32>, vector<64x128xf32> -> vector<64x128xf32>
    %c0_5 = arith.constant 0 : index
    %c0_6 = arith.constant 0 : index
    %6 = vector.load %arg3[%c0_5, %c0_6] : memref<1x128xf32, #tpu.memory_space<vmem>>, vector<1x128xf32>
    %7 = vector.broadcast %6 : vector<1x128xf32> to vector<64x128xf32>
    %8 = arith.mulf %5, %7 : vector<64x128xf32>
    %9 = arith.subf %0, %8 : vector<64x128xf32>
    %c0_7 = arith.constant 0 : index
    %c0_8 = arith.constant 0 : index
    %10 = vector.load %arg5[%c0_7, %c0_8] : memref<64x128xf32, #tpu.memory_space<vmem>>, vector<64x128xf32>
    tpu.vector_store %arg5[%c0_7, %c0_8], %9 {strides = array<i32>} : memref<64x128xf32, #tpu.memory_space<vmem>>, vector<64x128xf32>,
    return
  }
  func.func @transform_0(%arg0: i32) -> (i32, i32) {
    %c0_i32 = arith.constant 0 : i32
    %c0_i32_0 = arith.constant 0 : i32
    return %arg0, %c0_i32 : i32, i32
  }
  func.func @transform_1(%arg0: i32) -> (i32, i32) {
    %c0_i32 = arith.constant 0 : i32
    %c0_i32_0 = arith.constant 0 : i32
    %c0_i32_1 = arith.constant 0 : i32
    return %c0_i32, %c0_i32_0 : i32, i32
  }
  func.func @transform_2(%arg0: i32) -> (i32, i32) {
    %c0_i32 = arith.constant 0 : i32
    %c0_i32_0 = arith.constant 0 : i32
    %c0_i32_1 = arith.constant 0 : i32
    return %c0_i32, %c0_i32_0 : i32, i32
  }
  func.func @transform_3(%arg0: i32) -> (i32, i32) {
    %c0_i32 = arith.constant 0 : i32
    %c0_i32_0 = arith.constant 0 : i32
    %c0_i32_1 = arith.constant 0 : i32
    return %c0_i32, %c0_i32_0 : i32, i32
  }
  func.func @transform_4(%arg0: i32) -> (i32, i32) {
    %c0_i32 = arith.constant 0 : i32
    %c0_i32_0 = arith.constant 0 : i32
    return %arg0, %c0_i32 : i32, i32
  }
}

</mosaic_0001>

<llo_original>
// kernel: tpu_custom_call.1
$region0: #{tpu_custom_call.1}
  #allocation0 [shape = 'u32[]', space=smem, size = 0x4, offset = 0x4, fixed_abs, tag = 'smem constant byte address 0x4 - core index']
  #allocation1 [shape = 'u32[144,128]{1,0:T(1,128)}', space=vmem, size = 0x12000, scoped, tag = 'internal scratch']
  %s0 = inlined_call_operand.hbm [shape: f32[128,128], index: 0, kind: input, shape index: {}]
  %s1 = inlined_call_operand.vmem [shape: f32[1,128], index: 1, kind: input, shape index: {}]
  %s2 = inlined_call_operand.vmem [shape: f32[1,128], index: 2, kind: input, shape index: {}]
  %s3 = inlined_call_operand.hbm [shape: f32[128,128], index: 3, kind: input, shape index: {}]
  %s4 = inlined_call_operand.hbm [shape: f32[128,128], index: 4, kind: output, shape index: {}]
  %s5 = sld [smem:[#allocation0]]
  $region57: #{tpu_custom_call.1} parent=0
    _
  %s7 = ssub.s32 1, %s5
  %s8 = scalar_select 0, %s7, %s5
  $region1: #{tpu_custom_call.1} parent=0
    #allocation2 [shape = 'u8[65536]{0}', space=vmem, size = 0x10000, scoped, tag = 'input window, operand 0']
    #allocation3 [shape = 's32[2]{0}', space=sflag, size = 0x8, scoped, tag = 'scoped memory for tpu_custom_call.1']
    #allocation4 [shape = 's32[2]{0}', space=sflag, size = 0x8, scoped, tag = 'scoped memory for tpu_custom_call.1']
    #allocation5 [shape = 'u8[65536]{0}', space=vmem, size = 0x10000, scoped, tag = 'input window, operand 3, single buffered']
    #allocation6 [shape = 's32[1]{0}', space=sflag, size = 0x4, scoped, tag = 'scoped memory for tpu_custom_call.1']
    #allocation7 [shape = 'u8[65536]{0}', space=vmem, size = 0x10000, scoped, tag = 'output window, operand 0']
    %9 = vsyncpa [#allocation3], 0
    %s10 = scalar_lea.sflag [#allocation3], 1
    %11 = vsyncpa %s10, 0
    %12 = vsyncpa [#allocation6], 0
    %13 = vsyncpa [#allocation4], 0
    %s14 = scalar_lea.sflag [#allocation4], 1
    %15 = vsyncpa %s14, 0
    loop: start=0, step=1, limit=4
    $region2: #{tpu_custom_call.1} parent=1 // loop_pre_header
      _
    $region3: #{tpu_custom_call.1} parent=1 // loop_header
      %s17 = sphi 0, %s21
      %p18 = scmp.ge.s32.totalorder %s17, 4
      %s27 = sphi 0, %s29
      %s30 = sphi 0, %s27
      %s31 = sphi 0, %s30
      %s47 = sphi 0, %s31
      %s51 = sphi 0, %s51
      %s53 = sphi 0, %s51
      %s54 = sphi 0, %s53
      %s68 = sphi 0, %s54
      %s72 = sphi 0, %s72
      %s74 = sphi 0, %s72
      %s75 = sphi 0, %s74
      %s89 = sphi 0, %s75
      %s93 = sphi 0, %s93
      %s95 = sphi 0, %s93
      %s96 = sphi 0, %s95
      %s110 = sphi 0, %s96
      %s116 = sphi 0, %s118
      %s119 = sphi 0, %s116
      %s120 = sphi 0, %s119
      %s136 = sphi 0, %s120
    $region4: #{tpu_custom_call.1} parent=1 // loop_header_branch
      %20 = sbr.rel (%p18) target = $region8
    $region5: #{tpu_custom_call.1} parent=1 // loop_body
      %s22 = ssub.s32 %s17, 1
      %s23 = ssub.s32 %s17, 2
      %s24 = sadd.s32 %s17, 1
      %s25 = ssub.s32 %s17, %s24
      %p26 = scmp.eq.s32.totalorder %s25, 0
      %s28 = sadd.s32 %s27, 1
      %s29 = scalar_select %p26, %s27, %s28
      %p32 = pneg %p26
      %p33 = scmp.eq.s32.totalorder %s17, 1
      %p34 = por %p32, %p33
      %p35 = scmp.ne.s32.totalorder %s27, %s30
      %p36 = scmp.eq.s32.totalorder %s17, 0
      %p37 = por %p35, %p36
      %p38 = scmp.ne.s32.totalorder %s27, %s30
      %p39 = scmp.eq.s32.totalorder %s22, 1
      %p40 = por %p38, %p39
      %p41 = scmp.ne.s32.totalorder %s30, %s31
      %p42 = scmp.eq.s32.totalorder %s22, 0
      %p43 = por %p41, %p42
      %p44 = scmp.ne.s32.totalorder %s30, %s31
      %p45 = scmp.eq.s32.totalorder %s23, 1
      %p46 = por %p44, %p45
      %p48 = scmp.ne.s32.totalorder %s31, %s47
      %p49 = scmp.eq.s32.totalorder %s23, 0
      %p50 = por %p48, %p49
      %s52 = sadd.s32 %s51, 1
      %p55 = scmp.eq.s32.totalorder %s17, 1
      %p56 = scmp.ne.s32.totalorder %s51, %s53
      %p57 = scmp.eq.s32.totalorder %s17, 0
      %p58 = por %p56, %p57
      %p59 = scmp.ne.s32.totalorder %s51, %s53
      %p60 = scmp.eq.s32.totalorder %s22, 1
      %p61 = por %p59, %p60
      %p62 = scmp.ne.s32.totalorder %s53, %s54
      %p63 = scmp.eq.s32.totalorder %s22, 0
      %p64 = por %p62, %p63
      %p65 = scmp.ne.s32.totalorder %s53, %s54
      %p66 = scmp.eq.s32.totalorder %s23, 1
      %p67 = por %p65, %p66
      %p69 = scmp.ne.s32.totalorder %s54, %s68
      %p70 = scmp.eq.s32.totalorder %s23, 0
      %p71 = por %p69, %p70
      %s73 = sadd.s32 %s72, 1
      %p76 = scmp.eq.s32.totalorder %s17, 1
      %p77 = scmp.ne.s32.totalorder %s72, %s74
      %p78 = scmp.eq.s32.totalorder %s17, 0
      %p79 = por %p77, %p78
      %p80 = scmp.ne.s32.totalorder %s72, %s74
      %p81 = scmp.eq.s32.totalorder %s22, 1
      %p82 = por %p80, %p81
      %p83 = scmp.ne.s32.totalorder %s74, %s75
      %p84 = scmp.eq.s32.totalorder %s22, 0
      %p85 = por %p83, %p84
      %p86 = scmp.ne.s32.totalorder %s74, %s75
      %p87 = scmp.eq.s32.totalorder %s23, 1
      %p88 = por %p86, %p87
      %p90 = scmp.ne.s32.totalorder %s75, %s89
      %p91 = scmp.eq.s32.totalorder %s23, 0
      %p92 = por %p90, %p91
      %s94 = sadd.s32 %s93, 1
      %p97 = scmp.eq.s32.totalorder %s17, 1
      %p98 = scmp.ne.s32.totalorder %s93, %s95
      %p99 = scmp.eq.s32.totalorder %s17, 0
      %p100 = por %p98, %p99
      %p101 = scmp.ne.s32.totalorder %s93, %s95
      %p102 = scmp.eq.s32.totalorder %s22, 1
      %p103 = por %p101, %p102
      %p104 = scmp.ne.s32.totalorder %s95, %s96
      %p105 = scmp.eq.s32.totalorder %s22, 0
      %p106 = por %p104, %p105
      %p107 = scmp.ne.s32.totalorder %s95, %s96
      %p108 = scmp.eq.s32.totalorder %s23, 1
      %p109 = por %p107, %p108
      %p111 = scmp.ne.s32.totalorder %s96, %s110
      %p112 = scmp.eq.s32.totalorder %s23, 0
      %p113 = por %p111, %p112
      %s114 = ssub.s32 %s17, %s24
      %p115 = scmp.eq.s32.totalorder %s114, 0
      %s117 = sadd.s32 %s116, 1
      %s118 = scalar_select %p115, %s116, %s117
      %p121 = pneg %p115
      %p122 = scmp.eq.s32.totalorder %s17, 1
      %p123 = por %p121, %p122
      %p124 = scmp.ne.s32.totalorder %s116, %s119
      %p125 = scmp.eq.s32.totalorder %s17, 0
      %p126 = por %p124, %p125
      %p127 = scmp.ne.s32.totalorder %s116, %s119
      %p128 = scmp.eq.s32.totalorder %s22, 1
      %p129 = por %p127, %p128
      %p130 = scmp.ne.s32.totalorder %s119, %s120
      %p131 = scmp.eq.s32.totalorder %s22, 0
      %p132 = por %p130, %p131
      %p133 = scmp.ne.s32.totalorder %s119, %s120
      %p134 = scmp.eq.s32.totalorder %s23, 1
      %p135 = por %p133, %p134
      %p137 = scmp.ne.s32.totalorder %s120, %s136
      %p138 = scmp.eq.s32.totalorder %s23, 0
      %p139 = por %p137, %p138
      %p140 = scmp.le.s32.totalorder 1, %s17
      %p141 = scmp.lt.s32.totalorder %s17, 3
      %p142 = pnand %p140, %p141
      %p143 = pneg %p142
      // Predicated region
      $region9: #{tpu_custom_call.1} parent=5 // pred_check
        _
      $region10: #{tpu_custom_call.1} parent=5 // pred_check_branch
        %145 = sbr.rel (%p142) target = $region12
      $region11: #{tpu_custom_call.1} parent=5 // pred_region
        %s146 = ssub.s32 %s17, 1
        // Predicated region
        $region13: #{tpu_custom_call.1} parent=11 // pred_check
          %p147 = pneg %p64
        $region14: #{tpu_custom_call.1} parent=11 // pred_check_branch
          %149 = sbr.rel (%p147) target = $region16
        $region15: #{tpu_custom_call.1} parent=11 // pred_region
          _
        $region16: #{tpu_custom_call.1} parent=11 // pred_fallthru
          _
        // Predicated region
        $region17: #{tpu_custom_call.1} parent=11 // pred_check
          %p150 = pneg %p85
        $region18: #{tpu_custom_call.1} parent=11 // pred_check_branch
          %152 = sbr.rel (%p150) target = $region20
        $region19: #{tpu_custom_call.1} parent=11 // pred_region
          _
        $region20: #{tpu_custom_call.1} parent=11 // pred_fallthru
          _
        // Predicated region
        $region21: #{tpu_custom_call.1} parent=11 // pred_check
          %p153 = pneg %p106
        $region22: #{tpu_custom_call.1} parent=11 // pred_check_branch
          %155 = sbr.rel (%p153) target = $region24
        $region23: #{tpu_custom_call.1} parent=11 // pred_region
          %s157 = ssub.s32 2048, 2048
          %158 = vsyncadd [#allocation6], %s157
          %s159 = sshll.u32 [#allocation5], 4
          %s160 = int_to_ptr.vmem [resolvable:$true] %s159
          %165 = dma.hbm_to_vmem [thread:$0]  %s3, 2048, %s160, [#allocation6], 128, 128, 8
        $region24: #{tpu_custom_call.1} parent=11 // pred_fallthru
          _
      $region12: #{tpu_custom_call.1} parent=5 // pred_fallthru
        _
      %p166 = scmp.lt.s32.totalorder %s17, 2
      // Predicated region
      $region25: #{tpu_custom_call.1} parent=5 // pred_check
        %p167 = pneg %p166
      $region26: #{tpu_custom_call.1} parent=5 // pred_check_branch
        %169 = sbr.rel (%p167) target = $region28
      $region27: #{tpu_custom_call.1} parent=5 // pred_region
        // Predicated region
        $region29: #{tpu_custom_call.1} parent=27 // pred_check
          %p170 = pneg %p37
        $region30: #{tpu_custom_call.1} parent=27 // pred_check_branch
          %172 = sbr.rel (%p170) target = $region32
        $region31: #{tpu_custom_call.1} parent=27 // pred_region
          %s173 = sand.u32 %s27, 1
          %s174 = scalar_lea.sflag [#allocation3], %s173
          %s175 = sand.u32 %s27, 1
          %s176 = smul.addr %s175, 64
          %s177 = scalar_lea.vmem [#allocation2], %s176
          %s178 = smul.u32 8, %s17
          %s180 = ssub.s32 1024, 1024
          %181 = vsyncadd %s174, %s180
          %s182 = smul.addr %s178, 128
          %s183 = scalar_lea.hbm %s0, %s182
          %s184 = sshll.u32 %s177, 4
          %s185 = int_to_ptr.vmem [resolvable:$true] %s184
          %190 = dma.hbm_to_vmem [thread:$0]  %s183, 1024, %s185, %s174, 128, 128, 8
        $region32: #{tpu_custom_call.1} parent=27 // pred_fallthru
          _
      $region28: #{tpu_custom_call.1} parent=5 // pred_fallthru
        _
      %p191 = scmp.le.s32.totalorder 1, %s17
      %p192 = scmp.lt.s32.totalorder %s17, 3
      %p193 = pnand %p191, %p192
      %p194 = pneg %p193
      // Predicated region
      $region33: #{tpu_custom_call.1} parent=5 // pred_check
        _
      $region34: #{tpu_custom_call.1} parent=5 // pred_check_branch
        %196 = sbr.rel (%p193) target = $region36
      $region35: #{tpu_custom_call.1} parent=5 // pred_region
        %s197 = ssub.s32 %s17, 1
        %s198 = sand.u32 %s30, 1
        %s199 = scalar_lea.sflag [#allocation3], %s198
        %s200 = sand.u32 %s30, 1
        %s201 = smul.addr %s200, 64
        %s202 = scalar_lea.vmem [#allocation2], %s201
        // Predicated region
        $region37: #{tpu_custom_call.1} parent=35 // pred_check
          %p203 = pneg %p43
        $region38: #{tpu_custom_call.1} parent=35 // pred_check_branch
          %205 = sbr.rel (%p203) target = $region40
        $region39: #{tpu_custom_call.1} parent=35 // pred_region
          %206 = dma.done %s199, 1024
        $region40: #{tpu_custom_call.1} parent=35 // pred_fallthru
          _
        // Predicated region
        $region41: #{tpu_custom_call.1} parent=35 // pred_check
          %p207 = pneg %p106
        $region42: #{tpu_custom_call.1} parent=35 // pred_check_branch
          %209 = sbr.rel (%p207) target = $region44
        $region43: #{tpu_custom_call.1} parent=35 // pred_region
          %210 = dma.done [#allocation6], 2048
        $region44: #{tpu_custom_call.1} parent=35 // pred_fallthru
          _
        %s211 = sand.u32 %s30, 1
        %s212 = scalar_lea.sflag [#allocation3], %s211
        %s213 = sand.u32 %s30, 1
        %s214 = smul.addr %s213, 64
        %s215 = scalar_lea.vmem [#allocation2], %s214
        %p216 = pneg %p43
        %p217 = pneg %p40
        %p218 = pneg %p64
        %p219 = pneg %p61
        %p220 = pneg %p85
        %p221 = pneg %p82
        %p222 = pneg %p106
        %p223 = pneg %p103
        %p224 = pneg %p132
        %p225 = pneg %p129
        %s226 = sand.u32 %s119, 1
        %s227 = scalar_lea.sflag [#allocation4], %s226
        %s228 = sand.u32 %s119, 1
        %s229 = smul.addr %s228, 64
        %s230 = scalar_lea.vmem [#allocation7], %s229
        %s231 = smul.u32 8, %s22
        %s232 = smul.u32 8, %s22
        %v233 = vld [vmem:[%s202] sm:$0xff]
        %v234 = vld [vmem:[%s202 + $0x8] sm:$0xff]
        %v235 = vld [vmem:[%s202 + $0x10] sm:$0xff]
        %v236 = vld [vmem:[%s202 + $0x18] sm:$0xff]
        %v237 = vld [vmem:[%s202 + $0x20] sm:$0xff]
        %v238 = vld [vmem:[%s202 + $0x28] sm:$0xff]
        %v239 = vld [vmem:[%s202 + $0x30] sm:$0xff]
        %v240 = vld [vmem:[%s202 + $0x38] sm:$0xff]
        %v241 = vld [vmem:[%s1] sm:$0x1]
        %v243 = vlaneseq
        %v244 = vshrl.u32 %v243, 7
        %v245 = vsub.s32 0, %v244
        %v246 = vrot.slane %v241, %v245
        %v248 = vmul.f32 %v233, %v246
        %v249 = vmul.f32 %v234, %v246
        %v250 = vmul.f32 %v235, %v246
        %v251 = vmul.f32 %v236, %v246
        %v252 = vmul.f32 %v237, %v246
        %v253 = vmul.f32 %v238, %v246
        %v254 = vmul.f32 %v239, %v246
        %v255 = vmul.f32 %v240, %v246
        %v256 = vld [vmem:[#allocation5] sm:$0xff]
        %v257 = vld [vmem:[#allocation5 + $0x8] sm:$0xff]
        %v258 = vld [vmem:[#allocation5 + $0x10] sm:$0xff]
        %v259 = vld [vmem:[#allocation5 + $0x18] sm:$0xff]
        %v260 = vld [vmem:[#allocation5 + $0x20] sm:$0xff]
        %v261 = vld [vmem:[#allocation5 + $0x28] sm:$0xff]
        %v262 = vld [vmem:[#allocation5 + $0x30] sm:$0xff]
        %v263 = vld [vmem:[#allocation5 + $0x38] sm:$0xff]
        %v264 = vld [vmem:[#allocation5 + $0x40] sm:$0xff]
        %v265 = vld [vmem:[#allocation5 + $0x48] sm:$0xff]
        %v266 = vld [vmem:[#allocation5 + $0x50] sm:$0xff]
        %v267 = vld [vmem:[#allocation5 + $0x58] sm:$0xff]
        %v268 = vld [vmem:[#allocation5 + $0x60] sm:$0xff]
        %v269 = vld [vmem:[#allocation5 + $0x68] sm:$0xff]
        %v270 = vld [vmem:[#allocation5 + $0x70] sm:$0xff]
        %v271 = vld [vmem:[#allocation5 + $0x78] sm:$0xff]
        %272 = vmatprep.subr.mxu0 0.0
        %v273 = vand.u32 %v256, 4294901760
        %274 = vmatpush1.msra.mxu0 %v273
        %275 = vmatprep.subr.mxu0 0.0
        %v276 = vand.u32 %v257, 4294901760
        %277 = vmatpush1.msra.mxu0 %v276
        %278 = vmatprep.subr.mxu0 0.0
        %v279 = vand.u32 %v258, 4294901760
        %280 = vmatpush1.msra.mxu0 %v279
        %281 = vmatprep.subr.mxu0 0.0
        %v282 = vand.u32 %v259, 4294901760
        %283 = vmatpush1.msra.mxu0 %v282
        %284 = vmatprep.subr.mxu0 0.0
        %v285 = vand.u32 %v260, 4294901760
        %286 = vmatpush1.msra.mxu0 %v285
        %287 = vmatprep.subr.mxu0 0.0
        %v288 = vand.u32 %v261, 4294901760
        %289 = vmatpush1.msra.mxu0 %v288
        %290 = vmatprep.subr.mxu0 0.0
        %v291 = vand.u32 %v262, 4294901760
        %292 = vmatpush1.msra.mxu0 %v291
        %293 = vmatprep.subr.mxu0 0.0
        %v294 = vand.u32 %v263, 4294901760
        %295 = vmatpush1.msra.mxu0 %v294
        %296 = vmatprep.subr.mxu0 0.0
        %v297 = vand.u32 %v264, 4294901760
        %298 = vmatpush1.msra.mxu0 %v297
        %299 = vmatprep.subr.mxu0 0.0
        %v300 = vand.u32 %v265, 4294901760
        %301 = vmatpush1.msra.mxu0 %v300
        %302 = vmatprep.subr.mxu0 0.0
        %v303 = vand.u32 %v266, 4294901760
        %304 = vmatpush1.msra.mxu0 %v303
        %305 = vmatprep.subr.mxu0 0.0
        %v306 = vand.u32 %v267, 4294901760
        %307 = vmatpush1.msra.mxu0 %v306
        %308 = vmatprep.subr.mxu0 0.0
        %v309 = vand.u32 %v268, 4294901760
        %310 = vmatpush1.msra.mxu0 %v309
        %311 = vmatprep.subr.mxu0 0.0
        %v312 = vand.u32 %v269, 4294901760
        %313 = vmatpush1.msra.mxu0 %v312
        %314 = vmatprep.subr.mxu0 0.0
        %v315 = vand.u32 %v270, 4294901760
        %316 = vmatpush1.msra.mxu0 %v315
        %317 = vmatprep.subr.mxu0 0.0
        %v318 = vand.u32 %v271, 4294901760
        %319 = vmatpush1.msra.mxu0 %v318
        %320 = vmatprep.subr.mxu0 0.0
        %321 = vmatpush1.msra.mxu0 0.0
        %322 = vmatprep.subr.mxu0 0.0
        %323 = vmatpush1.msra.mxu0 0.0
        %324 = vmatprep.subr.mxu0 0.0
        %325 = vmatpush1.msra.mxu0 0.0
        %326 = vmatprep.subr.mxu0 0.0
        %327 = vmatpush1.msra.mxu0 0.0
        %328 = vmatprep.subr.mxu0 0.0
        %329 = vmatpush1.msra.mxu0 0.0
        %330 = vmatprep.subr.mxu0 0.0
        %331 = vmatpush1.msra.mxu0 0.0
        %332 = vmatprep.subr.mxu0 0.0
        %333 = vmatpush1.msra.mxu0 0.0
        %334 = vmatprep.subr.mxu0 0.0
        %335 = vmatpush1.msra.mxu0 0.0
        %336 = vmatprep.subr.mxu0 0.0
        %337 = vmatpush1.msra.mxu0 0.0
        %338 = vmatprep.subr.mxu0 0.0
        %339 = vmatpush1.msra.mxu0 0.0
        %340 = vmatprep.subr.mxu0 0.0
        %341 = vmatpush1.msra.mxu0 0.0
        %342 = vmatprep.subr.mxu0 0.0
        %343 = vmatpush1.msra.mxu0 0.0
        %344 = vmatprep.subr.mxu0 0.0
        %345 = vmatpush1.msra.mxu0 0.0
        %346 = vmatprep.subr.mxu0 0.0
        %347 = vmatpush1.msra.mxu0 0.0
        %348 = vmatprep.subr.mxu0 0.0
        %349 = vmatpush1.msra.mxu0 0.0
        %350 = vmatprep.subr.mxu0 0.0
        %351 = vmatpush1.msra.mxu0 0.0
        %352 = vmatprep.mubr.f32.mxu0 0.0
        %v353 = vand.u32 %v248, 4294901760
        %v354 = vsub.f32 %v248, %v353
        %v355 = vand.u32 %v354, 4294901760
        %v356 = vsub.f32 %v354, %v355
        %v357 = vand.u32 %v356, 4294901760
        %358 = vmatmul.mubr.f32.gmra.mrb[0].mxu0 %v357
        %v359 = vpop.f32.mrb[0].mxu0
        %v360 = vadd.f32 0.0, %v359
        %v361 = vpop.f32.mrb[0].mxu0
        %362 = vmatprep.mubr.f32.mxu0 0.0
        %v363 = vand.u32 %v249, 4294901760
        %v364 = vsub.f32 %v249, %v363
        %v365 = vand.u32 %v364, 4294901760
        %v366 = vsub.f32 %v364, %v365
        %v367 = vand.u32 %v366, 4294901760
        %368 = vmatmul.mubr.f32.gmra.mrb[0].mxu0 %v367
        %v369 = vpop.f32.mrb[0].mxu0
        %v370 = vadd.f32 0.0, %v369
        %v371 = vpop.f32.mrb[0].mxu0
        %372 = vmatprep.mubr.f32.mxu0 0.0
        %v373 = vand.u32 %v250, 4294901760
        %v374 = vsub.f32 %v250, %v373
        %v375 = vand.u32 %v374, 4294901760
        %v376 = vsub.f32 %v374, %v375
        %v377 = vand.u32 %v376, 4294901760
        %378 = vmatmul.mubr.f32.gmra.mrb[0].mxu0 %v377
        %v379 = vpop.f32.mrb[0].mxu0
        %v380 = vadd.f32 0.0, %v379
        %v381 = vpop.f32.mrb[0].mxu0
        %382 = vmatprep.mubr.f32.mxu0 0.0
        %v383 = vand.u32 %v251, 4294901760
        %v384 = vsub.f32 %v251, %v383
        %v385 = vand.u32 %v384, 4294901760
        %v386 = vsub.f32 %v384, %v385
        %v387 = vand.u32 %v386, 4294901760
        %388 = vmatmul.mubr.f32.gmra.mrb[0].mxu0 %v387
        %v389 = vpop.f32.mrb[0].mxu0
        %v390 = vadd.f32 0.0, %v389
        %v391 = vpop.f32.mrb[0].mxu0
        %392 = vmatprep.mubr.f32.mxu0 0.0
        %v393 = vand.u32 %v252, 4294901760
        %v394 = vsub.f32 %v252, %v393
        %v395 = vand.u32 %v394, 4294901760
        %v396 = vsub.f32 %v394, %v395
        %v397 = vand.u32 %v396, 4294901760
        %398 = vmatmul.mubr.f32.gmra.mrb[0].mxu0 %v397
        %v399 = vpop.f32.mrb[0].mxu0
        %v400 = vadd.f32 0.0, %v399
        %v401 = vpop.f32.mrb[0].mxu0
        %402 = vmatprep.mubr.f32.mxu0 0.0
        %v403 = vand.u32 %v253, 4294901760
        %v404 = vsub.f32 %v253, %v403
        %v405 = vand.u32 %v404, 4294901760
        %v406 = vsub.f32 %v404, %v405
        %v407 = vand.u32 %v406, 4294901760
        %408 = vmatmul.mubr.f32.gmra.mrb[0].mxu0 %v407
        %v409 = vpop.f32.mrb[0].mxu0
        %v410 = vadd.f32 0.0, %v409
        %v411 = vpop.f32.mrb[0].mxu0
        %412 = vmatprep.mubr.f32.mxu0 0.0
        %v413 = vand.u32 %v254, 4294901760
        %v414 = vsub.f32 %v254, %v413
        %v415 = vand.u32 %v414, 4294901760
        %v416 = vsub.f32 %v414, %v415
        %v417 = vand.u32 %v416, 4294901760
        %418 = vmatmul.mubr.f32.gmra.mrb[0].mxu0 %v417
        %v419 = vpop.f32.mrb[0].mxu0
        %v420 = vadd.f32 0.0, %v419
        %v421 = vpop.f32.mrb[0].mxu0
        %422 = vmatprep.mubr.f32.mxu0 0.0
        %v423 = vand.u32 %v255, 4294901760
        %v424 = vsub.f32 %v255, %v423
        %v425 = vand.u32 %v424, 4294901760
        %v426 = vsub.f32 %v424, %v425
        %v427 = vand.u32 %v426, 4294901760
        %428 = vmatmul.mubr.f32.gmra.mrb[0].mxu0 %v427
        %v429 = vpop.f32.mrb[0].mxu0
        %v430 = vadd.f32 0.0, %v429
        %v431 = vpop.f32.mrb[0].mxu0
        %432 = vdwg.mxu0
        %433 = vmatprep.subr.mxu0 0.0
        %v434 = vand.u32 %v256, 4294901760
        %v435 = vsub.f32 %v256, %v434
        %v436 = vand.u32 %v435, 4294901760
        %v437 = vsub.f32 %v435, %v436
        %v438 = vand.u32 %v437, 4294901760
        %439 = vmatpush1.msra.mxu0 %v438
        %440 = vmatprep.subr.mxu0 0.0
        %v441 = vand.u32 %v257, 4294901760
        %v442 = vsub.f32 %v257, %v441
        %v443 = vand.u32 %v442, 4294901760
        %v444 = vsub.f32 %v442, %v443
        %v445 = vand.u32 %v444, 4294901760
        %446 = vmatpush1.msra.mxu0 %v445
        %447 = vmatprep.subr.mxu0 0.0
        %v448 = vand.u32 %v258, 4294901760
        %v449 = vsub.f32 %v258, %v448
        %v450 = vand.u32 %v449, 4294901760
        %v451 = vsub.f32 %v449, %v450
        %v452 = vand.u32 %v451, 4294901760
        %453 = vmatpush1.msra.mxu0 %v452
        %454 = vmatprep.subr.mxu0 0.0
        %v455 = vand.u32 %v259, 4294901760
        %v456 = vsub.f32 %v259, %v455
        %v457 = vand.u32 %v456, 4294901760
        %v458 = vsub.f32 %v456, %v457
        %v459 = vand.u32 %v458, 4294901760
        %460 = vmatpush1.msra.mxu0 %v459
        %461 = vmatprep.subr.mxu0 0.0
        %v462 = vand.u32 %v260, 4294901760
        %v463 = vsub.f32 %v260, %v462
        %v464 = vand.u32 %v463, 4294901760
        %v465 = vsub.f32 %v463, %v464
        %v466 = vand.u32 %v465, 4294901760
        %467 = vmatpush1.msra.mxu0 %v466
        %468 = vmatprep.subr.mxu0 0.0
        %v469 = vand.u32 %v261, 4294901760
        %v470 = vsub.f32 %v261, %v469
        %v471 = vand.u32 %v470, 4294901760
        %v472 = vsub.f32 %v470, %v471
        %v473 = vand.u32 %v472, 4294901760
        %474 = vmatpush1.msra.mxu0 %v473
        %475 = vmatprep.subr.mxu0 0.0
        %v476 = vand.u32 %v262, 4294901760
        %v477 = vsub.f32 %v262, %v476
        %v478 = vand.u32 %v477, 4294901760
        %v479 = vsub.f32 %v477, %v478
        %v480 = vand.u32 %v479, 4294901760
        %481 = vmatpush1.msra.mxu0 %v480
        %482 = vmatprep.subr.mxu0 0.0
        %v483 = vand.u32 %v263, 4294901760
        %v484 = vsub.f32 %v263, %v483
        %v485 = vand.u32 %v484, 4294901760
        %v486 = vsub.f32 %v484, %v485
        %v487 = vand.u32 %v486, 4294901760
        %488 = vmatpush1.msra.mxu0 %v487
        %489 = vmatprep.subr.mxu0 0.0
        %v490 = vand.u32 %v264, 4294901760
        %v491 = vsub.f32 %v264, %v490
        %v492 = vand.u32 %v491, 4294901760
        %v493 = vsub.f32 %v491, %v492
        %v494 = vand.u32 %v493, 4294901760
        %495 = vmatpush1.msra.mxu0 %v494
        %496 = vmatprep.subr.mxu0 0.0
        %v497 = vand.u32 %v265, 4294901760
        %v498 = vsub.f32 %v265, %v497
        %v499 = vand.u32 %v498, 4294901760
        %v500 = vsub.f32 %v498, %v499
        %v501 = vand.u32 %v500, 4294901760
        %502 = vmatpush1.msra.mxu0 %v501
        %503 = vmatprep.subr.mxu0 0.0
        %v504 = vand.u32 %v266, 4294901760
        %v505 = vsub.f32 %v266, %v504
        %v506 = vand.u32 %v505, 4294901760
        %v507 = vsub.f32 %v505, %v506
        %v508 = vand.u32 %v507, 4294901760
        %509 = vmatpush1.msra.mxu0 %v508
        %510 = vmatprep.subr.mxu0 0.0
        %v511 = vand.u32 %v267, 4294901760
        %v512 = vsub.f32 %v267, %v511
        %v513 = vand.u32 %v512, 4294901760
        %v514 = vsub.f32 %v512, %v513
        %v515 = vand.u32 %v514, 4294901760
        %516 = vmatpush1.msra.mxu0 %v515
        %517 = vmatprep.subr.mxu0 0.0
        %v518 = vand.u32 %v268, 4294901760
        %v519 = vsub.f32 %v268, %v518
        %v520 = vand.u32 %v519, 4294901760
        %v521 = vsub.f32 %v519, %v520
        %v522 = vand.u32 %v521, 4294901760
        %523 = vmatpush1.msra.mxu0 %v522
        %524 = vmatprep.subr.mxu0 0.0
        %v525 = vand.u32 %v269, 4294901760
        %v526 = vsub.f32 %v269, %v525
        %v527 = vand.u32 %v526, 4294901760
        %v528 = vsub.f32 %v526, %v527
        %v529 = vand.u32 %v528, 4294901760
        %530 = vmatpush1.msra.mxu0 %v529
        %531 = vmatprep.subr.mxu0 0.0
        %v532 = vand.u32 %v270, 4294901760
        %v533 = vsub.f32 %v270, %v532
        %v534 = vand.u32 %v533, 4294901760
        %v535 = vsub.f32 %v533, %v534
        %v536 = vand.u32 %v535, 4294901760
        %537 = vmatpush1.msra.mxu0 %v536
        %538 = vmatprep.subr.mxu0 0.0
        %v539 = vand.u32 %v271, 4294901760
        %v540 = vsub.f32 %v271, %v539
        %v541 = vand.u32 %v540, 4294901760
        %v542 = vsub.f32 %v540, %v541
        %v543 = vand.u32 %v542, 4294901760
        %544 = vmatpush1.msra.mxu0 %v543
        %545 = vmatprep.subr.mxu0 0.0
        %546 = vmatpush1.msra.mxu0 0.0
        %547 = vmatprep.subr.mxu0 0.0
        %548 = vmatpush1.msra.mxu0 0.0
        %549 = vmatprep.subr.mxu0 0.0
        %550 = vmatpush1.msra.mxu0 0.0
        %551 = vmatprep.subr.mxu0 0.0
        %552 = vmatpush1.msra.mxu0 0.0
        %553 = vmatprep.subr.mxu0 0.0
        %554 = vmatpush1.msra.mxu0 0.0
        %555 = vmatprep.subr.mxu0 0.0
        %556 = vmatpush1.msra.mxu0 0.0
        %557 = vmatprep.subr.mxu0 0.0
        %558 = vmatpush1.msra.mxu0 0.0
        %559 = vmatprep.subr.mxu0 0.0
        %560 = vmatpush1.msra.mxu0 0.0
        %561 = vmatprep.subr.mxu0 0.0
        %562 = vmatpush1.msra.mxu0 0.0
        %563 = vmatprep.subr.mxu0 0.0
        %564 = vmatpush1.msra.mxu0 0.0
        %565 = vmatprep.subr.mxu0 0.0
        %566 = vmatpush1.msra.mxu0 0.0
        %567 = vmatprep.subr.mxu0 0.0
        %568 = vmatpush1.msra.mxu0 0.0
        %569 = vmatprep.subr.mxu0 0.0
        %570 = vmatpush1.msra.mxu0 0.0
        %571 = vmatprep.subr.mxu0 0.0
        %572 = vmatpush1.msra.mxu0 0.0
        %573 = vmatprep.subr.mxu0 0.0
        %574 = vmatpush1.msra.mxu0 0.0
        %575 = vmatprep.subr.mxu0 0.0
        %576 = vmatpush1.msra.mxu0 0.0
        %577 = vmatprep.mubr.f32.mxu0 0.0
        %v578 = vand.u32 %v248, 4294901760
        %579 = vmatmul.mubr.f32.gmra.mrb[0].mxu0 %v578
        %v580 = vpop.f32.mrb[0].mxu0
        %v581 = vadd.f32 %v360, %v580
        %v582 = vpop.f32.mrb[0].mxu0
        %583 = vmatprep.mubr.f32.mxu0 0.0
        %v584 = vand.u32 %v249, 4294901760
        %585 = vmatmul.mubr.f32.gmra.mrb[0].mxu0 %v584
        %v586 = vpop.f32.mrb[0].mxu0
        %v587 = vadd.f32 %v370, %v586
        %v588 = vpop.f32.mrb[0].mxu0
        %589 = vmatprep.mubr.f32.mxu0 0.0
        %v590 = vand.u32 %v250, 4294901760
        %591 = vmatmul.mubr.f32.gmra.mrb[0].mxu0 %v590
        %v592 = vpop.f32.mrb[0].mxu0
        %v593 = vadd.f32 %v380, %v592
        %v594 = vpop.f32.mrb[0].mxu0
        %595 = vmatprep.mubr.f32.mxu0 0.0
        %v596 = vand.u32 %v251, 4294901760
        %597 = vmatmul.mubr.f32.gmra.mrb[0].mxu0 %v596
        %v598 = vpop.f32.mrb[0].mxu0
        %v599 = vadd.f32 %v390, %v598
        %v600 = vpop.f32.mrb[0].mxu0
        %601 = vmatprep.mubr.f32.mxu0 0.0
        %v602 = vand.u32 %v252, 4294901760
        %603 = vmatmul.mubr.f32.gmra.mrb[0].mxu0 %v602
        %v604 = vpop.f32.mrb[0].mxu0
        %v605 = vadd.f32 %v400, %v604
        %v606 = vpop.f32.mrb[0].mxu0
        %607 = vmatprep.mubr.f32.mxu0 0.0
        %v608 = vand.u32 %v253, 4294901760
        %609 = vmatmul.mubr.f32.gmra.mrb[0].mxu0 %v608
        %v610 = vpop.f32.mrb[0].mxu0
        %v611 = vadd.f32 %v410, %v610
        %v612 = vpop.f32.mrb[0].mxu0
        %613 = vmatprep.mubr.f32.mxu0 0.0
        %v614 = vand.u32 %v254, 4294901760
        %615 = vmatmul.mubr.f32.gmra.mrb[0].mxu0 %v614
        %v616 = vpop.f32.mrb[0].mxu0
        %v617 = vadd.f32 %v420, %v616
        %v618 = vpop.f32.mrb[0].mxu0
        %619 = vmatprep.mubr.f32.mxu0 0.0
        %v620 = vand.u32 %v255, 4294901760
        %621 = vmatmul.mubr.f32.gmra.mrb[0].mxu0 %v620
        %v622 = vpop.f32.mrb[0].mxu0
        %v623 = vadd.f32 %v430, %v622
        %v624 = vpop.f32.mrb[0].mxu0
        %625 = vdwg.mxu0
        %626 = vmatprep.subr.mxu0 0.0
        %v627 = vand.u32 %v256, 4294901760
        %v628 = vsub.f32 %v256, %v627
        %629 = vmatpush1.msra.mxu0 %v628
        %630 = vmatprep.subr.mxu0 0.0
        %v631 = vand.u32 %v257, 4294901760
        %v632 = vsub.f32 %v257, %v631
        %633 = vmatpush1.msra.mxu0 %v632
        %634 = vmatprep.subr.mxu0 0.0
        %v635 = vand.u32 %v258, 4294901760
        %v636 = vsub.f32 %v258, %v635
        %637 = vmatpush1.msra.mxu0 %v636
        %638 = vmatprep.subr.mxu0 0.0
        %v639 = vand.u32 %v259, 4294901760
        %v640 = vsub.f32 %v259, %v639
        %641 = vmatpush1.msra.mxu0 %v640
        %642 = vmatprep.subr.mxu0 0.0
        %v643 = vand.u32 %v260, 4294901760
        %v644 = vsub.f32 %v260, %v643
        %645 = vmatpush1.msra.mxu0 %v644
        %646 = vmatprep.subr.mxu0 0.0
        %v647 = vand.u32 %v261, 4294901760
        %v648 = vsub.f32 %v261, %v647
        %649 = vmatpush1.msra.mxu0 %v648
        %650 = vmatprep.subr.mxu0 0.0
        %v651 = vand.u32 %v262, 4294901760
        %v652 = vsub.f32 %v262, %v651
        %653 = vmatpush1.msra.mxu0 %v652
        %654 = vmatprep.subr.mxu0 0.0
        %v655 = vand.u32 %v263, 4294901760
        %v656 = vsub.f32 %v263, %v655
        %657 = vmatpush1.msra.mxu0 %v656
        %658 = vmatprep.subr.mxu0 0.0
        %v659 = vand.u32 %v264, 4294901760
        %v660 = vsub.f32 %v264, %v659
        %661 = vmatpush1.msra.mxu0 %v660
        %662 = vmatprep.subr.mxu0 0.0
        %v663 = vand.u32 %v265, 4294901760
        %v664 = vsub.f32 %v265, %v663
        %665 = vmatpush1.msra.mxu0 %v664
        %666 = vmatprep.subr.mxu0 0.0
        %v667 = vand.u32 %v266, 4294901760
        %v668 = vsub.f32 %v266, %v667
        %669 = vmatpush1.msra.mxu0 %v668
        %670 = vmatprep.subr.mxu0 0.0
        %v671 = vand.u32 %v267, 4294901760
        %v672 = vsub.f32 %v267, %v671
        %673 = vmatpush1.msra.mxu0 %v672
        %674 = vmatprep.subr.mxu0 0.0
        %v675 = vand.u32 %v268, 4294901760
        %v676 = vsub.f32 %v268, %v675
        %677 = vmatpush1.msra.mxu0 %v676
        %678 = vmatprep.subr.mxu0 0.0
        %v679 = vand.u32 %v269, 4294901760
        %v680 = vsub.f32 %v269, %v679
        %681 = vmatpush1.msra.mxu0 %v680
        %682 = vmatprep.subr.mxu0 0.0
        %v683 = vand.u32 %v270, 4294901760
        %v684 = vsub.f32 %v270, %v683
        %685 = vmatpush1.msra.mxu0 %v684
        %686 = vmatprep.subr.mxu0 0.0
        %v687 = vand.u32 %v271, 4294901760
        %v688 = vsub.f32 %v271, %v687
        %689 = vmatpush1.msra.mxu0 %v688
        %690 = vmatprep.subr.mxu0 0.0
        %691 = vmatpush1.msra.mxu0 0.0
        %692 = vmatprep.subr.mxu0 0.0
        %693 = vmatpush1.msra.mxu0 0.0
        %694 = vmatprep.subr.mxu0 0.0
        %695 = vmatpush1.msra.mxu0 0.0
        %696 = vmatprep.subr.mxu0 0.0
        %697 = vmatpush1.msra.mxu0 0.0
        %698 = vmatprep.subr.mxu0 0.0
        %699 = vmatpush1.msra.mxu0 0.0
        %700 = vmatprep.subr.mxu0 0.0
        %701 = vmatpush1.msra.mxu0 0.0
        %702 = vmatprep.subr.mxu0 0.0
        %703 = vmatpush1.msra.mxu0 0.0
        %704 = vmatprep.subr.mxu0 0.0
        %705 = vmatpush1.msra.mxu0 0.0
        %706 = vmatprep.subr.mxu0 0.0
        %707 = vmatpush1.msra.mxu0 0.0
        %708 = vmatprep.subr.mxu0 0.0
        %709 = vmatpush1.msra.mxu0 0.0
        %710 = vmatprep.subr.mxu0 0.0
        %711 = vmatpush1.msra.mxu0 0.0
        %712 = vmatprep.subr.mxu0 0.0
        %713 = vmatpush1.msra.mxu0 0.0
        %714 = vmatprep.subr.mxu0 0.0
        %715 = vmatpush1.msra.mxu0 0.0
        %716 = vmatprep.subr.mxu0 0.0
        %717 = vmatpush1.msra.mxu0 0.0
        %718 = vmatprep.subr.mxu0 0.0
        %719 = vmatpush1.msra.mxu0 0.0
        %720 = vmatprep.subr.mxu0 0.0
        %721 = vmatpush1.msra.mxu0 0.0
        %722 = vmatprep.mubr.f32.mxu0 0.0
        %v723 = vand.u32 %v248, 4294901760
        %v724 = vsub.f32 %v248, %v723
        %725 = vmatmul.mubr.f32.gmra.mrb[0].mxu0 %v724
        %v726 = vpop.f32.mrb[0].mxu0
        %v727 = vadd.f32 %v581, %v726
        %v728 = vpop.f32.mrb[0].mxu0
        %729 = vmatprep.mubr.f32.mxu0 0.0
        %v730 = vand.u32 %v249, 4294901760
        %v731 = vsub.f32 %v249, %v730
        %732 = vmatmul.mubr.f32.gmra.mrb[0].mxu0 %v731
        %v733 = vpop.f32.mrb[0].mxu0
        %v734 = vadd.f32 %v587, %v733
        %v735 = vpop.f32.mrb[0].mxu0
        %736 = vmatprep.mubr.f32.mxu0 0.0
        %v737 = vand.u32 %v250, 4294901760
        %v738 = vsub.f32 %v250, %v737
        %739 = vmatmul.mubr.f32.gmra.mrb[0].mxu0 %v738
        %v740 = vpop.f32.mrb[0].mxu0
        %v741 = vadd.f32 %v593, %v740
        %v742 = vpop.f32.mrb[0].mxu0
        %743 = vmatprep.mubr.f32.mxu0 0.0
        %v744 = vand.u32 %v251, 4294901760
        %v745 = vsub.f32 %v251, %v744
        %746 = vmatmul.mubr.f32.gmra.mrb[0].mxu0 %v745
        %v747 = vpop.f32.mrb[0].mxu0
        %v748 = vadd.f32 %v599, %v747
        %v749 = vpop.f32.mrb[0].mxu0
        %750 = vmatprep.mubr.f32.mxu0 0.0
        %v751 = vand.u32 %v252, 4294901760
        %v752 = vsub.f32 %v252, %v751
        %753 = vmatmul.mubr.f32.gmra.mrb[0].mxu0 %v752
        %v754 = vpop.f32.mrb[0].mxu0
        %v755 = vadd.f32 %v605, %v754
        %v756 = vpop.f32.mrb[0].mxu0
        %757 = vmatprep.mubr.f32.mxu0 0.0
        %v758 = vand.u32 %v253, 4294901760
        %v759 = vsub.f32 %v253, %v758
        %760 = vmatmul.mubr.f32.gmra.mrb[0].mxu0 %v759
        %v761 = vpop.f32.mrb[0].mxu0
        %v762 = vadd.f32 %v611, %v761
        %v763 = vpop.f32.mrb[0].mxu0
        %764 = vmatprep.mubr.f32.mxu0 0.0
        %v765 = vand.u32 %v254, 4294901760
        %v766 = vsub.f32 %v254, %v765
        %767 = vmatmul.mubr.f32.gmra.mrb[0].mxu0 %v766
        %v768 = vpop.f32.mrb[0].mxu0
        %v769 = vadd.f32 %v617, %v768
        %v770 = vpop.f32.mrb[0].mxu0
        %771 = vmatprep.mubr.f32.mxu0 0.0
        %v772 = vand.u32 %v255, 4294901760
        %v773 = vsub.f32 %v255, %v772
        %774 = vmatmul.mubr.f32.gmra.mrb[0].mxu0 %v773
        %v775 = vpop.f32.mrb[0].mxu0
        %v776 = vadd.f32 %v623, %v775
        %v777 = vpop.f32.mrb[0].mxu0
        %778 = vdwg.mxu0
        %779 = vmatprep.subr.mxu0 0.0
        %v780 = vand.u32 %v256, 4294901760
        %781 = vmatpush1.msra.mxu0 %v780
        %782 = vmatprep.subr.mxu0 0.0
        %v783 = vand.u32 %v257, 4294901760
        %784 = vmatpush1.msra.mxu0 %v783
        %785 = vmatprep.subr.mxu0 0.0
        %v786 = vand.u32 %v258, 4294901760
        %787 = vmatpush1.msra.mxu0 %v786
        %788 = vmatprep.subr.mxu0 0.0
        %v789 = vand.u32 %v259, 4294901760
        %790 = vmatpush1.msra.mxu0 %v789
        %791 = vmatprep.subr.mxu0 0.0
        %v792 = vand.u32 %v260, 4294901760
        %793 = vmatpush1.msra.mxu0 %v792
        %794 = vmatprep.subr.mxu0 0.0
        %v795 = vand.u32 %v261, 4294901760
        %796 = vmatpush1.msra.mxu0 %v795
        %797 = vmatprep.subr.mxu0 0.0
        %v798 = vand.u32 %v262, 4294901760
        %799 = vmatpush1.msra.mxu0 %v798
        %800 = vmatprep.subr.mxu0 0.0
        %v801 = vand.u32 %v263, 4294901760
        %802 = vmatpush1.msra.mxu0 %v801
        %803 = vmatprep.subr.mxu0 0.0
        %v804 = vand.u32 %v264, 4294901760
        %805 = vmatpush1.msra.mxu0 %v804
        %806 = vmatprep.subr.mxu0 0.0
        %v807 = vand.u32 %v265, 4294901760
        %808 = vmatpush1.msra.mxu0 %v807
        %809 = vmatprep.subr.mxu0 0.0
        %v810 = vand.u32 %v266, 4294901760
        %811 = vmatpush1.msra.mxu0 %v810
        %812 = vmatprep.subr.mxu0 0.0
        %v813 = vand.u32 %v267, 4294901760
        %814 = vmatpush1.msra.mxu0 %v813
        %815 = vmatprep.subr.mxu0 0.0
        %v816 = vand.u32 %v268, 4294901760
        %817 = vmatpush1.msra.mxu0 %v816
        %818 = vmatprep.subr.mxu0 0.0
        %v819 = vand.u32 %v269, 4294901760
        %820 = vmatpush1.msra.mxu0 %v819
        %821 = vmatprep.subr.mxu0 0.0
        %v822 = vand.u32 %v270, 4294901760
        %823 = vmatpush1.msra.mxu0 %v822
        %824 = vmatprep.subr.mxu0 0.0
        %v825 = vand.u32 %v271, 4294901760
        %826 = vmatpush1.msra.mxu0 %v825
        %827 = vmatprep.subr.mxu0 0.0
        %828 = vmatpush1.msra.mxu0 0.0
        %829 = vmatprep.subr.mxu0 0.0
        %830 = vmatpush1.msra.mxu0 0.0
        %831 = vmatprep.subr.mxu0 0.0
        %832 = vmatpush1.msra.mxu0 0.0
        %833 = vmatprep.subr.mxu0 0.0
        %834 = vmatpush1.msra.mxu0 0.0
        %835 = vmatprep.subr.mxu0 0.0
        %836 = vmatpush1.msra.mxu0 0.0
        %837 = vmatprep.subr.mxu0 0.0
        %838 = vmatpush1.msra.mxu0 0.0
        %839 = vmatprep.subr.mxu0 0.0
        %840 = vmatpush1.msra.mxu0 0.0
        %841 = vmatprep.subr.mxu0 0.0
        %842 = vmatpush1.msra.mxu0 0.0
        %843 = vmatprep.subr.mxu0 0.0
        %844 = vmatpush1.msra.mxu0 0.0
        %845 = vmatprep.subr.mxu0 0.0
        %846 = vmatpush1.msra.mxu0 0.0
        %847 = vmatprep.subr.mxu0 0.0
        %848 = vmatpush1.msra.mxu0 0.0
        %849 = vmatprep.subr.mxu0 0.0
        %850 = vmatpush1.msra.mxu0 0.0
        %851 = vmatprep.subr.mxu0 0.0
        %852 = vmatpush1.msra.mxu0 0.0
        %853 = vmatprep.subr.mxu0 0.0
        %854 = vmatpush1.msra.mxu0 0.0
        %855 = vmatprep.subr.mxu0 0.0
        %856 = vmatpush1.msra.mxu0 0.0
        %857 = vmatprep.subr.mxu0 0.0
        %858 = vmatpush1.msra.mxu0 0.0
        %859 = vmatprep.mubr.f32.mxu0 0.0
        %v860 = vand.u32 %v248, 4294901760
        %v861 = vsub.f32 %v248, %v860
        %v862 = vand.u32 %v861, 4294901760
        %863 = vmatmul.mubr.f32.gmra.mrb[0].mxu0 %v862
        %v864 = vpop.f32.mrb[0].mxu0
        %v865 = vadd.f32 %v727, %v864
        %v866 = vpop.f32.mrb[0].mxu0
        %867 = vmatprep.mubr.f32.mxu0 0.0
        %v868 = vand.u32 %v249, 4294901760
        %v869 = vsub.f32 %v249, %v868
        %v870 = vand.u32 %v869, 4294901760
        %871 = vmatmul.mubr.f32.gmra.mrb[0].mxu0 %v870
        %v872 = vpop.f32.mrb[0].mxu0
        %v873 = vadd.f32 %v734, %v872
        %v874 = vpop.f32.mrb[0].mxu0
        %875 = vmatprep.mubr.f32.mxu0 0.0
        %v876 = vand.u32 %v250, 4294901760
        %v877 = vsub.f32 %v250, %v876
        %v878 = vand.u32 %v877, 4294901760
        %879 = vmatmul.mubr.f32.gmra.mrb[0].mxu0 %v878
        %v880 = vpop.f32.mrb[0].mxu0
        %v881 = vadd.f32 %v741, %v880
        %v882 = vpop.f32.mrb[0].mxu0
        %883 = vmatprep.mubr.f32.mxu0 0.0
        %v884 = vand.u32 %v251, 4294901760
        %v885 = vsub.f32 %v251, %v884
        %v886 = vand.u32 %v885, 4294901760
        %887 = vmatmul.mubr.f32.gmra.mrb[0].mxu0 %v886
        %v888 = vpop.f32.mrb[0].mxu0
        %v889 = vadd.f32 %v748, %v888
        %v890 = vpop.f32.mrb[0].mxu0
        %891 = vmatprep.mubr.f32.mxu0 0.0
        %v892 = vand.u32 %v252, 4294901760
        %v893 = vsub.f32 %v252, %v892
        %v894 = vand.u32 %v893, 4294901760
        %895 = vmatmul.mubr.f32.gmra.mrb[0].mxu0 %v894
        %v896 = vpop.f32.mrb[0].mxu0
        %v897 = vadd.f32 %v755, %v896
        %v898 = vpop.f32.mrb[0].mxu0
        %899 = vmatprep.mubr.f32.mxu0 0.0
        %v900 = vand.u32 %v253, 4294901760
        %v901 = vsub.f32 %v253, %v900
        %v902 = vand.u32 %v901, 4294901760
        %903 = vmatmul.mubr.f32.gmra.mrb[0].mxu0 %v902
        %v904 = vpop.f32.mrb[0].mxu0
        %v905 = vadd.f32 %v762, %v904
        %v906 = vpop.f32.mrb[0].mxu0
        %907 = vmatprep.mubr.f32.mxu0 0.0
        %v908 = vand.u32 %v254, 4294901760
        %v909 = vsub.f32 %v254, %v908
        %v910 = vand.u32 %v909, 4294901760
        %911 = vmatmul.mubr.f32.gmra.mrb[0].mxu0 %v910
        %v912 = vpop.f32.mrb[0].mxu0
        %v913 = vadd.f32 %v769, %v912
        %v914 = vpop.f32.mrb[0].mxu0
        %915 = vmatprep.mubr.f32.mxu0 0.0
        %v916 = vand.u32 %v255, 4294901760
        %v917 = vsub.f32 %v255, %v916
        %v918 = vand.u32 %v917, 4294901760
        %919 = vmatmul.mubr.f32.gmra.mrb[0].mxu0 %v918
        %v920 = vpop.f32.mrb[0].mxu0
        %v921 = vadd.f32 %v776, %v920
        %v922 = vpop.f32.mrb[0].mxu0
        %923 = vdwg.mxu0
        %924 = vmatprep.subr.mxu0 0.0
        %v925 = vand.u32 %v256, 4294901760
        %v926 = vsub.f32 %v256, %v925
        %v927 = vand.u32 %v926, 4294901760
        %928 = vmatpush1.msra.mxu0 %v927
        %929 = vmatprep.subr.mxu0 0.0
        %v930 = vand.u32 %v257, 4294901760
        %v931 = vsub.f32 %v257, %v930
        %v932 = vand.u32 %v931, 4294901760
        %933 = vmatpush1.msra.mxu0 %v932
        %934 = vmatprep.subr.mxu0 0.0
        %v935 = vand.u32 %v258, 4294901760
        %v936 = vsub.f32 %v258, %v935
        %v937 = vand.u32 %v936, 4294901760
        %938 = vmatpush1.msra.mxu0 %v937
        %939 = vmatprep.subr.mxu0 0.0
        %v940 = vand.u32 %v259, 4294901760
        %v941 = vsub.f32 %v259, %v940
        %v942 = vand.u32 %v941, 4294901760
        %943 = vmatpush1.msra.mxu0 %v942
        %944 = vmatprep.subr.mxu0 0.0
        %v945 = vand.u32 %v260, 4294901760
        %v946 = vsub.f32 %v260, %v945
        %v947 = vand.u32 %v946, 4294901760
        %948 = vmatpush1.msra.mxu0 %v947
        %949 = vmatprep.subr.mxu0 0.0
        %v950 = vand.u32 %v261, 4294901760
        %v951 = vsub.f32 %v261, %v950
        %v952 = vand.u32 %v951, 4294901760
        %953 = vmatpush1.msra.mxu0 %v952
        %954 = vmatprep.subr.mxu0 0.0
        %v955 = vand.u32 %v262, 4294901760
        %v956 = vsub.f32 %v262, %v955
        %v957 = vand.u32 %v956, 4294901760
        %958 = vmatpush1.msra.mxu0 %v957
        %959 = vmatprep.subr.mxu0 0.0
        %v960 = vand.u32 %v263, 4294901760
        %v961 = vsub.f32 %v263, %v960
        %v962 = vand.u32 %v961, 4294901760
        %963 = vmatpush1.msra.mxu0 %v962
        %964 = vmatprep.subr.mxu0 0.0
        %v965 = vand.u32 %v264, 4294901760
        %v966 = vsub.f32 %v264, %v965
        %v967 = vand.u32 %v966, 4294901760
        %968 = vmatpush1.msra.mxu0 %v967
        %969 = vmatprep.subr.mxu0 0.0
        %v970 = vand.u32 %v265, 4294901760
        %v971 = vsub.f32 %v265, %v970
        %v972 = vand.u32 %v971, 4294901760
        %973 = vmatpush1.msra.mxu0 %v972
        %974 = vmatprep.subr.mxu0 0.0
        %v975 = vand.u32 %v266, 4294901760
        %v976 = vsub.f32 %v266, %v975
        %v977 = vand.u32 %v976, 4294901760
        %978 = vmatpush1.msra.mxu0 %v977
        %979 = vmatprep.subr.mxu0 0.0
        %v980 = vand.u32 %v267, 4294901760
        %v981 = vsub.f32 %v267, %v980
        %v982 = vand.u32 %v981, 4294901760
        %983 = vmatpush1.msra.mxu0 %v982
        %984 = vmatprep.subr.mxu0 0.0
        %v985 = vand.u32 %v268, 4294901760
        %v986 = vsub.f32 %v268, %v985
        %v987 = vand.u32 %v986, 4294901760
        %988 = vmatpush1.msra.mxu0 %v987
        %989 = vmatprep.subr.mxu0 0.0
        %v990 = vand.u32 %v269, 4294901760
        %v991 = vsub.f32 %v269, %v990
        %v992 = vand.u32 %v991, 4294901760
        %993 = vmatpush1.msra.mxu0 %v992
        %994 = vmatprep.subr.mxu0 0.0
        %v995 = vand.u32 %v270, 4294901760
        %v996 = vsub.f32 %v270, %v995
        %v997 = vand.u32 %v996, 4294901760
        %998 = vmatpush1.msra.mxu0 %v997
        %999 = vmatprep.subr.mxu0 0.0
        %v1000 = vand.u32 %v271, 4294901760
        %v1001 = vsub.f32 %v271, %v1000
        %v1002 = vand.u32 %v1001, 4294901760
        %1003 = vmatpush1.msra.mxu0 %v1002
        %1004 = vmatprep.subr.mxu0 0.0
        %1005 = vmatpush1.msra.mxu0 0.0
        %1006 = vmatprep.subr.mxu0 0.0
        %1007 = vmatpush1.msra.mxu0 0.0
        %1008 = vmatprep.subr.mxu0 0.0
        %1009 = vmatpush1.msra.mxu0 0.0
        %1010 = vmatprep.subr.mxu0 0.0
        %1011 = vmatpush1.msra.mxu0 0.0
        %1012 = vmatprep.subr.mxu0 0.0
        %1013 = vmatpush1.msra.mxu0 0.0
        %1014 = vmatprep.subr.mxu0 0.0
        %1015 = vmatpush1.msra.mxu0 0.0
        %1016 = vmatprep.subr.mxu0 0.0
        %1017 = vmatpush1.msra.mxu0 0.0
        %1018 = vmatprep.subr.mxu0 0.0
        %1019 = vmatpush1.msra.mxu0 0.0
        %1020 = vmatprep.subr.mxu0 0.0
        %1021 = vmatpush1.msra.mxu0 0.0
        %1022 = vmatprep.subr.mxu0 0.0
        %1023 = vmatpush1.msra.mxu0 0.0
        %1024 = vmatprep.subr.mxu0 0.0
        %1025 = vmatpush1.msra.mxu0 0.0
        %1026 = vmatprep.subr.mxu0 0.0
        %1027 = vmatpush1.msra.mxu0 0.0
        %1028 = vmatprep.subr.mxu0 0.0
        %1029 = vmatpush1.msra.mxu0 0.0
        %1030 = vmatprep.subr.mxu0 0.0
        %1031 = vmatpush1.msra.mxu0 0.0
        %1032 = vmatprep.subr.mxu0 0.0
        %1033 = vmatpush1.msra.mxu0 0.0
        %1034 = vmatprep.subr.mxu0 0.0
        %1035 = vmatpush1.msra.mxu0 0.0
        %1036 = vmatprep.mubr.f32.mxu0 0.0
        %v1037 = vand.u32 %v248, 4294901760
        %1038 = vmatmul.mubr.f32.gmra.mrb[0].mxu0 %v1037
        %v1039 = vpop.f32.mrb[0].mxu0
        %v1040 = vadd.f32 %v865, %v1039
        %v1041 = vpop.f32.mrb[0].mxu0
        %1042 = vmatprep.mubr.f32.mxu0 0.0
        %v1043 = vand.u32 %v249, 4294901760
        %1044 = vmatmul.mubr.f32.gmra.mrb[0].mxu0 %v1043
        %v1045 = vpop.f32.mrb[0].mxu0
        %v1046 = vadd.f32 %v873, %v1045
        %v1047 = vpop.f32.mrb[0].mxu0
        %1048 = vmatprep.mubr.f32.mxu0 0.0
        %v1049 = vand.u32 %v250, 4294901760
        %1050 = vmatmul.mubr.f32.gmra.mrb[0].mxu0 %v1049
        %v1051 = vpop.f32.mrb[0].mxu0
        %v1052 = vadd.f32 %v881, %v1051
        %v1053 = vpop.f32.mrb[0].mxu0
        %1054 = vmatprep.mubr.f32.mxu0 0.0
        %v1055 = vand.u32 %v251, 4294901760
        %1056 = vmatmul.mubr.f32.gmra.mrb[0].mxu0 %v1055
        %v1057 = vpop.f32.mrb[0].mxu0
        %v1058 = vadd.f32 %v889, %v1057
        %v1059 = vpop.f32.mrb[0].mxu0
        %1060 = vmatprep.mubr.f32.mxu0 0.0
        %v1061 = vand.u32 %v252, 4294901760
        %1062 = vmatmul.mubr.f32.gmra.mrb[0].mxu0 %v1061
        %v1063 = vpop.f32.mrb[0].mxu0
        %v1064 = vadd.f32 %v897, %v1063
        %v1065 = vpop.f32.mrb[0].mxu0
        %1066 = vmatprep.mubr.f32.mxu0 0.0
        %v1067 = vand.u32 %v253, 4294901760
        %1068 = vmatmul.mubr.f32.gmra.mrb[0].mxu0 %v1067
        %v1069 = vpop.f32.mrb[0].mxu0
        %v1070 = vadd.f32 %v905, %v1069
        %v1071 = vpop.f32.mrb[0].mxu0
        %1072 = vmatprep.mubr.f32.mxu0 0.0
        %v1073 = vand.u32 %v254, 4294901760
        %1074 = vmatmul.mubr.f32.gmra.mrb[0].mxu0 %v1073
        %v1075 = vpop.f32.mrb[0].mxu0
        %v1076 = vadd.f32 %v913, %v1075
        %v1077 = vpop.f32.mrb[0].mxu0
        %1078 = vmatprep.mubr.f32.mxu0 0.0
        %v1079 = vand.u32 %v255, 4294901760
        %1080 = vmatmul.mubr.f32.gmra.mrb[0].mxu0 %v1079
        %v1081 = vpop.f32.mrb[0].mxu0
        %v1082 = vadd.f32 %v921, %v1081
        %v1083 = vpop.f32.mrb[0].mxu0
        %1084 = vdwg.mxu0
        %1085 = vmatprep.subr.mxu0 0.0
        %v1086 = vand.u32 %v256, 4294901760
        %1087 = vmatpush1.msra.mxu0 %v1086
        %1088 = vmatprep.subr.mxu0 0.0
        %v1089 = vand.u32 %v257, 4294901760
        %1090 = vmatpush1.msra.mxu0 %v1089
        %1091 = vmatprep.subr.mxu0 0.0
        %v1092 = vand.u32 %v258, 4294901760
        %1093 = vmatpush1.msra.mxu0 %v1092
        %1094 = vmatprep.subr.mxu0 0.0
        %v1095 = vand.u32 %v259, 4294901760
        %1096 = vmatpush1.msra.mxu0 %v1095
        %1097 = vmatprep.subr.mxu0 0.0
        %v1098 = vand.u32 %v260, 4294901760
        %1099 = vmatpush1.msra.mxu0 %v1098
        %1100 = vmatprep.subr.mxu0 0.0
        %v1101 = vand.u32 %v261, 4294901760
        %1102 = vmatpush1.msra.mxu0 %v1101
        %1103 = vmatprep.subr.mxu0 0.0
        %v1104 = vand.u32 %v262, 4294901760
        %1105 = vmatpush1.msra.mxu0 %v1104
        %1106 = vmatprep.subr.mxu0 0.0
        %v1107 = vand.u32 %v263, 4294901760
        %1108 = vmatpush1.msra.mxu0 %v1107
        %1109 = vmatprep.subr.mxu0 0.0
        %v1110 = vand.u32 %v264, 4294901760
        %1111 = vmatpush1.msra.mxu0 %v1110
        %1112 = vmatprep.subr.mxu0 0.0
        %v1113 = vand.u32 %v265, 4294901760
        %1114 = vmatpush1.msra.mxu0 %v1113
        %1115 = vmatprep.subr.mxu0 0.0
        %v1116 = vand.u32 %v266, 4294901760
        %1117 = vmatpush1.msra.mxu0 %v1116
        %1118 = vmatprep.subr.mxu0 0.0
        %v1119 = vand.u32 %v267, 4294901760
        %1120 = vmatpush1.msra.mxu0 %v1119
        %1121 = vmatprep.subr.mxu0 0.0
        %v1122 = vand.u32 %v268, 4294901760
        %1123 = vmatpush1.msra.mxu0 %v1122
        %1124 = vmatprep.subr.mxu0 0.0
        %v1125 = vand.u32 %v269, 4294901760
        %1126 = vmatpush1.msra.mxu0 %v1125
        %1127 = vmatprep.subr.mxu0 0.0
        %v1128 = vand.u32 %v270, 4294901760
        %1129 = vmatpush1.msra.mxu0 %v1128
        %1130 = vmatprep.subr.mxu0 0.0
        %v1131 = vand.u32 %v271, 4294901760
        %1132 = vmatpush1.msra.mxu0 %v1131
        %1133 = vmatprep.subr.mxu0 0.0
        %1134 = vmatpush1.msra.mxu0 0.0
        %1135 = vmatprep.subr.mxu0 0.0
        %1136 = vmatpush1.msra.mxu0 0.0
        %1137 = vmatprep.subr.mxu0 0.0
        %1138 = vmatpush1.msra.mxu0 0.0
        %1139 = vmatprep.subr.mxu0 0.0
        %1140 = vmatpush1.msra.mxu0 0.0
        %1141 = vmatprep.subr.mxu0 0.0
        %1142 = vmatpush1.msra.mxu0 0.0
        %1143 = vmatprep.subr.mxu0 0.0
        %1144 = vmatpush1.msra.mxu0 0.0
        %1145 = vmatprep.subr.mxu0 0.0
        %1146 = vmatpush1.msra.mxu0 0.0
        %1147 = vmatprep.subr.mxu0 0.0
        %1148 = vmatpush1.msra.mxu0 0.0
        %1149 = vmatprep.subr.mxu0 0.0
        %1150 = vmatpush1.msra.mxu0 0.0
        %1151 = vmatprep.subr.mxu0 0.0
        %1152 = vmatpush1.msra.mxu0 0.0
        %1153 = vmatprep.subr.mxu0 0.0
        %1154 = vmatpush1.msra.mxu0 0.0
        %1155 = vmatprep.subr.mxu0 0.0
        %1156 = vmatpush1.msra.mxu0 0.0
        %1157 = vmatprep.subr.mxu0 0.0
        %1158 = vmatpush1.msra.mxu0 0.0
        %1159 = vmatprep.subr.mxu0 0.0
        %1160 = vmatpush1.msra.mxu0 0.0
        %1161 = vmatprep.subr.mxu0 0.0
        %1162 = vmatpush1.msra.mxu0 0.0
        %1163 = vmatprep.subr.mxu0 0.0
        %1164 = vmatpush1.msra.mxu0 0.0
        %1165 = vmatprep.mubr.f32.mxu0 0.0
        %v1166 = vand.u32 %v248, 4294901760
        %1167 = vmatmul.mubr.f32.gmra.mrb[0].mxu0 %v1166
        %v1168 = vpop.f32.mrb[0].mxu0
        %v1169 = vadd.f32 %v1040, %v1168
        %v1170 = vpop.f32.mrb[0].mxu0
        %1171 = vmatprep.mubr.f32.mxu0 0.0
        %v1172 = vand.u32 %v249, 4294901760
        %1173 = vmatmul.mubr.f32.gmra.mrb[0].mxu0 %v1172
        %v1174 = vpop.f32.mrb[0].mxu0
        %v1175 = vadd.f32 %v1046, %v1174
        %v1176 = vpop.f32.mrb[0].mxu0
        %1177 = vmatprep.mubr.f32.mxu0 0.0
        %v1178 = vand.u32 %v250, 4294901760
        %1179 = vmatmul.mubr.f32.gmra.mrb[0].mxu0 %v1178
        %v1180 = vpop.f32.mrb[0].mxu0
        %v1181 = vadd.f32 %v1052, %v1180
        %v1182 = vpop.f32.mrb[0].mxu0
        %1183 = vmatprep.mubr.f32.mxu0 0.0
        %v1184 = vand.u32 %v251, 4294901760
        %1185 = vmatmul.mubr.f32.gmra.mrb[0].mxu0 %v1184
        %v1186 = vpop.f32.mrb[0].mxu0
        %v1187 = vadd.f32 %v1058, %v1186
        %v1188 = vpop.f32.mrb[0].mxu0
        %1189 = vmatprep.mubr.f32.mxu0 0.0
        %v1190 = vand.u32 %v252, 4294901760
        %1191 = vmatmul.mubr.f32.gmra.mrb[0].mxu0 %v1190
        %v1192 = vpop.f32.mrb[0].mxu0
        %v1193 = vadd.f32 %v1064, %v1192
        %v1194 = vpop.f32.mrb[0].mxu0
        %1195 = vmatprep.mubr.f32.mxu0 0.0
        %v1196 = vand.u32 %v253, 4294901760
        %1197 = vmatmul.mubr.f32.gmra.mrb[0].mxu0 %v1196
        %v1198 = vpop.f32.mrb[0].mxu0
        %v1199 = vadd.f32 %v1070, %v1198
        %v1200 = vpop.f32.mrb[0].mxu0
        %1201 = vmatprep.mubr.f32.mxu0 0.0
        %v1202 = vand.u32 %v254, 4294901760
        %1203 = vmatmul.mubr.f32.gmra.mrb[0].mxu0 %v1202
        %v1204 = vpop.f32.mrb[0].mxu0
        %v1205 = vadd.f32 %v1076, %v1204
        %v1206 = vpop.f32.mrb[0].mxu0
        %1207 = vmatprep.mubr.f32.mxu0 0.0
        %v1208 = vand.u32 %v255, 4294901760
        %1209 = vmatmul.mubr.f32.gmra.mrb[0].mxu0 %v1208
        %v1210 = vpop.f32.mrb[0].mxu0
        %v1211 = vadd.f32 %v1082, %v1210
        %v1212 = vpop.f32.mrb[0].mxu0
        %1213 = vdwg.mxu0
        %v1214 = vld [vmem:[%s2] sm:$0x1]
        %v1216 = vlaneseq
        %v1217 = vshrl.u32 %v1216, 7
        %v1218 = vsub.s32 0, %v1217
        %v1219 = vrot.slane %v1214, %v1218
        %v1221 = vmul.f32 %v1169, %v1219
        %v1222 = vmul.f32 %v1175, %v1219
        %v1223 = vmul.f32 %v1181, %v1219
        %v1224 = vmul.f32 %v1187, %v1219
        %v1225 = vmul.f32 %v1193, %v1219
        %v1226 = vmul.f32 %v1199, %v1219
        %v1227 = vmul.f32 %v1205, %v1219
        %v1228 = vmul.f32 %v1211, %v1219
        %v1229 = vsub.f32 %v233, %v1221
        %v1230 = vsub.f32 %v234, %v1222
        %v1231 = vsub.f32 %v235, %v1223
        %v1232 = vsub.f32 %v236, %v1224
        %v1233 = vsub.f32 %v237, %v1225
        %v1234 = vsub.f32 %v238, %v1226
        %v1235 = vsub.f32 %v239, %v1227
        %v1236 = vsub.f32 %v240, %v1228
        %1237 = vst [vmem:[%s230] sm:$0xff] %v1229
        %1238 = vst [vmem:[%s230 + $0x8] sm:$0xff] %v1230
        %1239 = vst [vmem:[%s230 + $0x10] sm:$0xff] %v1231
        %1240 = vst [vmem:[%s230 + $0x18] sm:$0xff] %v1232
        %1241 = vst [vmem:[%s230 + $0x20] sm:$0xff] %v1233
        %1242 = vst [vmem:[%s230 + $0x28] sm:$0xff] %v1234
        %1243 = vst [vmem:[%s230 + $0x30] sm:$0xff] %v1235
        %1244 = vst [vmem:[%s230 + $0x38] sm:$0xff] %v1236
        %s1245 = sand.u32 %s119, 1
        %s1246 = scalar_lea.sflag [#allocation4], %s1245
        %s1247 = sand.u32 %s119, 1
        %s1248 = smul.addr %s1247, 64
        %s1249 = scalar_lea.vmem [#allocation7], %s1248
        // Predicated region
        $region45: #{tpu_custom_call.1} parent=35 // pred_check
          %p1250 = pneg %p129
        $region46: #{tpu_custom_call.1} parent=35 // pred_check_branch
          %1252 = sbr.rel (%p1250) target = $region48
        $region47: #{tpu_custom_call.1} parent=35 // pred_region
          %s1253 = smul.u32 8, %s22
          %s1255 = ssub.s32 1024, 1024
          %1256 = vsyncadd %s1246, %s1255
          %s1257 = smul.addr %s1253, 128
          %s1258 = scalar_lea.hbm %s4, %s1257
          %s1259 = sshll.u32 %s1249, 4
          %s1260 = int_to_ptr.vmem [resolvable:$true] %s1259
          %1265 = dma.vmem_to_hbm [thread:$0]  %s1260, 1024, %s1258, %s1246, 128, 128, 8
        $region48: #{tpu_custom_call.1} parent=35 // pred_fallthru
          _
      $region36: #{tpu_custom_call.1} parent=5 // pred_fallthru
        _
      %p1266 = scmp.le.s32.totalorder 2, %s17
      // Predicated region
      $region49: #{tpu_custom_call.1} parent=5 // pred_check
        %p1267 = pneg %p1266
      $region50: #{tpu_custom_call.1} parent=5 // pred_check_branch
        %1269 = sbr.rel (%p1267) target = $region52
      $region51: #{tpu_custom_call.1} parent=5 // pred_region
        %s1270 = ssub.s32 %s17, 2
        // Predicated region
        $region53: #{tpu_custom_call.1} parent=51 // pred_check
          %p1271 = pneg %p135
        $region54: #{tpu_custom_call.1} parent=51 // pred_check_branch
          %1273 = sbr.rel (%p1271) target = $region56
        $region55: #{tpu_custom_call.1} parent=51 // pred_region
          %s1274 = sand.u32 %s120, 1
          %s1275 = scalar_lea.sflag [#allocation4], %s1274
          %s1276 = sand.u32 %s120, 1
          %s1277 = smul.addr %s1276, 64
          %s1278 = scalar_lea.vmem [#allocation7], %s1277
          %1279 = dma.done %s1275, 1024
        $region56: #{tpu_custom_call.1} parent=51 // pred_fallthru
          _
      $region52: #{tpu_custom_call.1} parent=5 // pred_fallthru
        _
    $region6: #{tpu_custom_call.1} parent=1 // loop_footer
      %s21 = sadd.s32 1, %s17
    $region7: #{tpu_custom_call.1} parent=1 // loop_footer_branch
      %16 = sbr.rel target = $region3
    $region8: #{tpu_custom_call.1} parent=1 // loop_exit
      _
    %1280 = vsyncpa [#allocation3], 1
    %s1281 = scalar_lea.sflag [#allocation3], 1
    %1282 = vsyncpa %s1281, 1
    %1283 = vsyncpa [#allocation6], 1
    %1284 = vsyncpa [#allocation4], 1
    %s1285 = scalar_lea.sflag [#allocation4], 1
    %1286 = vsyncpa %s1285, 1

</llo_original>
